<compile_context>
chip_gen: v5e
topology: v5e:2x2
jax: 0.10.0
libtpu: 0.0.40
codegen_flags: <defaults>
</compile_context>

<pallas_src>
import jax
import jax.numpy as jnp
from jax import lax
from jax.experimental import pallas as pl
from jax.experimental.pallas import tpu as pltpu

IN_FEATURES = 784
HIDDEN = 256
OUT_FEATURES = 1
TILE_B = 512  # 512x784 f32 tile ~1.6 MiB; double-buffered ~3.2 MiB -> fits every gen


def discriminator_kernel(x_ref, w1_ref, b1_ref, w2_ref, b2_ref, o_ref):
    # Cast the activation tile to bf16 in-kernel (VPU work hidden under the DMA).
    x_bf = x_ref[...].astype(jnp.bfloat16)

    # Layer 1: Linear(784 -> 256) + ReLU.  bf16 MXU inputs, f32 accumulate,
    # f32 elementwise (bias add / ReLU).
    h = jnp.dot(x_bf, w1_ref[...], preferred_element_type=jnp.float32)
    h = jnp.maximum(h + b1_ref[...], 0.0)            # b1 (1,256) broadcasts over rows

    # Layer 2: Linear(256 -> 1) as a trans-B matmul so the result is lane-dense:
    #   (1, 256) x (tile_b, 256)^T -> (1, tile_b)
    z = lax.dot_general(
        w2_ref[...], h.astype(jnp.bfloat16),
        dimension_numbers=(((1,), (1,)), ((), ())),
        preferred_element_type=jnp.float32)
    z = z + b2_ref[0, 0]                              # scalar bias from SMEM

    # sigmoid(z) = 1 / (1 + exp(-z)); exp and approx reciprocal both hit the EUP.
    o_ref[...] = pl.reciprocal(1.0 + jnp.exp(-z), approx=True)


def _round_up(n: int, m: int) -> int:
    return ((n + m - 1) // m) * m


def _choose_tile_b(batch: int) -> int:
    # Fixed 512-row tile for real batches (pipelining + v7x megacore balance);
    # small batches get a single 8-row-aligned block.
    if batch >= TILE_B:
        return TILE_B
    return max(8, _round_up(batch, 8))


def discriminator_forward(x, w1, b1, w2, b2):
    B = x.shape[0]
    x = x.astype(jnp.float32)                         # pass f32; cast in-kernel

    tile_b = _choose_tile_b(B)
    num_tiles = pl.cdiv(B, tile_b)
    b_pad = num_tiles * tile_b
    if b_pad != B:
        # Pad a few rows of x rather than shrinking the tile or relying on
        # implicit out-of-bounds masking; padded output rows are sliced away.
        x = jnp.pad(x, ((0, b_pad - B), (0, 0)))

    # Weights as bf16 for the MXU; biases stay f32.
    w1_bf = w1.astype(jnp.bfloat16)                               # (784, 256)
    w2_row = w2.reshape(HIDDEN, OUT_FEATURES).T.astype(jnp.bfloat16)  # (1, 256)
    b1_f32 = b1.reshape(1, HIDDEN).astype(jnp.float32)
    b2_smem = b2.reshape(1, 1).astype(jnp.float32)

    out = pl.pallas_call(
        discriminator_kernel,
        # Lane-dense output: one (1, tile_b) row per grid step.
        out_shape=jax.ShapeDtypeStruct((num_tiles, tile_b), jnp.float32),
        grid=(num_tiles,),
        in_specs=[
            # Batch-tiled activation: new tile per grid step (double-buffered DMA).
            pl.BlockSpec((tile_b, IN_FEATURES), lambda i: (i, 0)),
            # Weights / biases: constant block index -> stay resident in VMEM.
            pl.BlockSpec((IN_FEATURES, HIDDEN), lambda i: (0, 0)),
            pl.BlockSpec((1, HIDDEN), lambda i: (0, 0)),
            pl.BlockSpec((1, HIDDEN), lambda i: (0, 0)),
            # Scalar output bias lives in SMEM (avoids a padded (8,128) VMEM tile).
            pl.BlockSpec(memory_space=pltpu.MemorySpace.SMEM),
        ],
        out_specs=pl.BlockSpec((1, tile_b), lambda i: (i, 0)),
        compiler_params=pltpu.CompilerParams(
            dimension_semantics=("parallel",),        # megacore sharding on v7x
        ),
    )(x, w1_bf, b1_f32, w2_row, b2_smem)

    # (num_tiles, tile_b) flattens in batch order; slice off padding, restore (B, 1).
    return out.reshape(b_pad, 1)[:B]


def init_params(key):
    """Deterministic init mirroring nn.Linear default (uniform +-1/sqrt(fan_in))."""
    k1, k2, k3, k4 = jax.random.split(key, 4)
    bound1 = 1.0 / jnp.sqrt(IN_FEATURES)
    bound2 = 1.0 / jnp.sqrt(HIDDEN)
    w1 = jax.random.uniform(k1, (IN_FEATURES, HIDDEN), jnp.float32, -bound1, bound1)
    b1 = jax.random.uniform(k2, (1, HIDDEN), jnp.float32, -bound1, bound1)
    w2 = jax.random.uniform(k3, (HIDDEN, OUT_FEATURES), jnp.float32, -bound2, bound2)
    b2 = jax.random.uniform(k4, (1, OUT_FEATURES), jnp.float32, -bound2, bound2)
    return w1, b1, w2, b2


def reference_forward(x, w1, b1, w2, b2):
    h = jnp.maximum(x @ w1 + b1, 0.0)
    return jax.nn.sigmoid(h @ w2 + b2)


if __name__ == "__main__":
    key = jax.random.PRNGKey(0)
    kx, kp = jax.random.split(key)

    B = 8  # small batch for the smoke test
    x = jax.random.normal(kx, (B, IN_FEATURES), dtype=jnp.float32)
    w1, b1, w2, b2 = init_params(kp)

    out = discriminator_forward(x, w1, b1, w2, b2)
    out = jax.block_until_ready(out)

    ref = reference_forward(x, w1, b1, w2, b2)
    assert out.shape == (B, OUT_FEATURES)
    # Tolerance reflects bf16 MXU weight inputs + the approximate EUP reciprocal.
    # Fine for a sigmoid probability output; revisit if reused for raw logits.
    assert jnp.allclose(out, ref.astype(out.dtype), atol=2e-2, rtol=0.0), \
        "mismatch vs reference"

    print("KERNEL_OK")
</pallas_src>

<mosaic_0001>
module attributes {stable_mosaic.version = 11 : i64} {
  func.func @discriminator_kernel(%arg0: i32, %arg1: memref<8x784xf32, #tpu.memory_space<vmem>>, %arg2: memref<784x256xbf16, #tpu.memory_space<vmem>>, %arg3: memref<1x256xf32, #tpu.memory_space<vmem>>, %arg4: memref<1x256xbf16, #tpu.memory_space<vmem>>, %arg5: memref<1x1xf32, #tpu.memory_space<smem>>, %arg6: memref<1x8xf32, #tpu.memory_space<vmem>>) attributes {dimension_semantics = [#tpu.dimension_semantics<parallel>], iteration_bounds = array<i64: 1>, scalar_prefetch = 0 : i64, scratch_operands = 0 : i64, tpu.core_type = #tpu.core_type<tc>, window_params = [{transform_indices = @transform_0, window_bounds = array<i64: 8, 784>}, {pipeline_mode = #tpu.pipeline_mode<synchronous>, transform_indices = @transform_1, window_bounds = array<i64: 784, 256>}, {pipeline_mode = #tpu.pipeline_mode<synchronous>, transform_indices = @transform_2, window_bounds = array<i64: 1, 256>}, {pipeline_mode = #tpu.pipeline_mode<synchronous>, transform_indices = @transform_3, window_bounds = array<i64: 1, 256>}, {transform_indices = @transform_4, window_bounds = array<i64: 1, 1>}, {transform_indices = @transform_5, window_bounds = array<i64: 1, 8>}]} {
    %c0 = arith.constant 0 : index
    %c0_0 = arith.constant 0 : index
    %0 = vector.load %arg1[%c0, %c0_0] : memref<8x784xf32, #tpu.memory_space<vmem>>, vector<8x784xf32>
    %1 = arith.truncf %0 : vector<8x784xf32> to vector<8x784xbf16>
    %c0_1 = arith.constant 0 : index
    %c0_2 = arith.constant 0 : index
    %2 = vector.load %arg2[%c0_1, %c0_2] : memref<784x256xbf16, #tpu.memory_space<vmem>>, vector<784x256xbf16>
    %cst = arith.constant dense<0.000000e+00> : vector<8x256xf32>
    %3 = tpu.matmul %1, %2, %cst {dimension_numbers = #tpu.dot_dimension_numbers<[1], [0], [0], [1], [0, 0, 1, 1], [], []>} : vector<8x784xbf16>, vector<784x256xbf16>, vector<8x256xf32> -> vector<8x256xf32>
    %c0_3 = arith.constant 0 : index
    %c0_4 = arith.constant 0 : index
    %4 = vector.load %arg3[%c0_3, %c0_4] : memref<1x256xf32, #tpu.memory_space<vmem>>, vector<1x256xf32>
    %5 = vector.broadcast %4 : vector<1x256xf32> to vector<8x256xf32>
    %6 = arith.addf %3, %5 : vector<8x256xf32>
    %cst_5 = arith.constant 0.000000e+00 : f32
    %7 = vector.broadcast %cst_5 : f32 to vector<8x256xf32>
    %8 = arith.maximumf %6, %7 : vector<8x256xf32>
    %c0_6 = arith.constant 0 : index
    %c0_7 = arith.constant 0 : index
    %9 = vector.load %arg4[%c0_6, %c0_7] : memref<1x256xbf16, #tpu.memory_space<vmem>>, vector<1x256xbf16>
    %10 = arith.truncf %8 : vector<8x256xf32> to vector<8x256xbf16>
    %cst_8 = arith.constant dense<0.000000e+00> : vector<1x8xf32>
    %11 = tpu.matmul %9, %10, %cst_8 {dimension_numbers = #tpu.dot_dimension_numbers<[1], [1], [0], [0], [0, 0, 1, 0], [], []>} : vector<1x256xbf16>, vector<8x256xbf16>, vector<1x8xf32> -> vector<1x8xf32>
    %c0_9 = arith.constant 0 : index
    %c0_10 = arith.constant 0 : index
    %12 = memref.load %arg5[%c0_9, %c0_10] : memref<1x1xf32, #tpu.memory_space<smem>>
    %13 = vector.broadcast %12 : f32 to vector<1x8xf32>
    %14 = arith.addf %11, %13 : vector<1x8xf32>
    %cst_11 = arith.constant 0.000000e+00 : f32
    %15 = vector.broadcast %cst_11 : f32 to vector<1x8xf32>
    %16 = arith.subf %15, %14 : vector<1x8xf32>
    %17 = math.exp %16 : vector<1x8xf32>
    %cst_12 = arith.constant 1.000000e+00 : f32
    %18 = vector.broadcast %cst_12 : f32 to vector<1x8xf32>
    %19 = arith.addf %18, %17 : vector<1x8xf32>
    %20 = tpu.reciprocal %19 {approx = true} : vector<1x8xf32> -> vector<1x8xf32>
    %c0_13 = arith.constant 0 : index
    %c0_14 = arith.constant 0 : index
    %21 = vector.load %arg6[%c0_13, %c0_14] : memref<1x8xf32, #tpu.memory_space<vmem>>, vector<1x8xf32>
    tpu.vector_store %arg6[%c0_13, %c0_14], %20 {strides = array<i32>} : memref<1x8xf32, #tpu.memory_space<vmem>>, vector<1x8xf32>,
    return
  }
  func.func @transform_0(%arg0: i32) -> (i32, i32) {
    %c0_i32 = arith.constant 0 : i32
    %c0_i32_0 = arith.constant 0 : i32
    return %arg0, %c0_i32 : i32, i32
  }
  func.func @transform_1(%arg0: i32) -> (i32, i32) {
    %c0_i32 = arith.constant 0 : i32
    %c0_i32_0 = arith.constant 0 : i32
    %c0_i32_1 = arith.constant 0 : i32
    return %c0_i32, %c0_i32_0 : i32, i32
  }
  func.func @transform_2(%arg0: i32) -> (i32, i32) {
    %c0_i32 = arith.constant 0 : i32
    %c0_i32_0 = arith.constant 0 : i32
    %c0_i32_1 = arith.constant 0 : i32
    return %c0_i32, %c0_i32_0 : i32, i32
  }
  func.func @transform_3(%arg0: i32) -> (i32, i32) {
    %c0_i32 = arith.constant 0 : i32
    %c0_i32_0 = arith.constant 0 : i32
    %c0_i32_1 = arith.constant 0 : i32
    return %c0_i32, %c0_i32_0 : i32, i32
  }
  func.func @transform_4(%arg0: i32) -> (i32, i32) {
    %c0_i32 = arith.constant 0 : i32
    %c0_i32_0 = arith.constant 0 : i32
    %c0_i32_1 = arith.constant 0 : i32
    return %c0_i32, %c0_i32_0 : i32, i32
  }
  func.func @transform_5(%arg0: i32) -> (i32, i32) {
    %c0_i32 = arith.constant 0 : i32
    %c0_i32_0 = arith.constant 0 : i32
    return %arg0, %c0_i32 : i32, i32
  }
}

</mosaic_0001>

<llo_original>
// kernel: tpu_custom_call.1
$region0: #{tpu_custom_call.1}
  #allocation0 [shape = 'u32[]', space=smem, size = 0x4, offset = 0x4, fixed_abs, tag = 'smem constant byte address 0x4 - core index']
  #allocation1 [shape = 'u32[72,128]{1,0:T(1,128)}', space=vmem, size = 0x9000, scoped, tag = 'internal scratch']
  #allocation2 [shape = 'f32[1,1]{1,0:T(1,128)S(6)}', space=smem, size = 0x200, scoped, tag = 'scoped memory for tpu_custom_call.1']
  %s0 = inlined_call_operand.hbm [shape: f32[8,784], index: 0, kind: input, shape index: {}]
  %s1 = inlined_call_operand.hbm [shape: bf16[784,256], index: 1, kind: input, shape index: {}]
  %s2 = inlined_call_operand.vmem [shape: f32[1,256], index: 2, kind: input, shape index: {}]
  %s3 = inlined_call_operand.vmem [shape: bf16[1,256], index: 3, kind: input, shape index: {}]
  %s4 = inlined_call_operand.<no memory space> [shape: f32[1,1], index: 4, kind: input, shape index: {}]
  %s5 = inlined_call_operand.hbm [shape: f32[1,8], index: 5, kind: output, shape index: {}]
  %s6 = sld [smem:[#allocation0]]
  $region38: #{tpu_custom_call.1} parent=0
    _
  %s8 = ssub.s32 1, %s6
  %s9 = scalar_select 0, %s8, %s6
  %10 = sst [smem:[#allocation2]] %s4
  $region1: #{tpu_custom_call.1} parent=0
    #allocation3 [shape = 'u8[28672]{0}', space=vmem, size = 0x7000, scoped, tag = 'input window, operand 0, single buffered']
    #allocation4 [shape = 's32[1]{0}', space=sflag, size = 0x4, scoped, tag = 'scoped memory for tpu_custom_call.1']
    #allocation5 [shape = 's32[1]{0}', space=sflag, size = 0x4, scoped, tag = 'scoped memory for tpu_custom_call.1']
    #allocation6 [shape = 'u8[401408]{0}', space=vmem, size = 0x62000, scoped, tag = 'input window, operand 1, single buffered']
    #allocation7 [shape = 's32[1]{0}', space=sflag, size = 0x4, scoped, tag = 'scoped memory for tpu_custom_call.1']
    #allocation8 [shape = 'u8[512]{0}', space=vmem, size = 0x400, scoped, tag = 'output window, operand 0, single buffered']
    %11 = vsyncpa [#allocation4], 0
    %12 = vsyncpa [#allocation7], 0
    %13 = vsyncpa [#allocation5], 0
    // Predicated region
    $region2: #{tpu_custom_call.1} parent=1 // pred_check
      _
    $region3: #{tpu_custom_call.1} parent=1 // pred_check_branch
      %15 = sbr.rel (0) target = $region5
    $region4: #{tpu_custom_call.1} parent=1 // pred_region
      %17 = vsyncadd [#allocation4], 0
      %s19 = sshll.u32 %s0, 4
      %s20 = int_to_ptr.hbm [resolvable:$true] %s19
      %s21 = sshll.u32 [#allocation3], 4
      %s22 = int_to_ptr.vmem [resolvable:$true] %s21
      %24 = dma.hbm_to_vmem [thread:$0]  %s20, 896, %s22, [#allocation4]
    $region5: #{tpu_custom_call.1} parent=1 // pred_fallthru
      _
    // Predicated region
    $region6: #{tpu_custom_call.1} parent=1 // pred_check
      _
    $region7: #{tpu_custom_call.1} parent=1 // pred_check_branch
      %26 = sbr.rel (0) target = $region9
    $region8: #{tpu_custom_call.1} parent=1 // pred_region
      %28 = vsyncadd [#allocation7], 0
      %s29 = sshll.u32 %s1, 4
      %s30 = int_to_ptr.hbm [resolvable:$true] %s29
      %s31 = sshll.u32 [#allocation6], 4
      %s32 = int_to_ptr.vmem [resolvable:$true] %s31
      %37 = dma.hbm_to_vmem [thread:$0]  %s30, 12544, %s32, [#allocation7], 128, 128, 8
    $region9: #{tpu_custom_call.1} parent=1 // pred_fallthru
      _
    // Predicated region
    $region10: #{tpu_custom_call.1} parent=1 // pred_check
      _
    $region11: #{tpu_custom_call.1} parent=1 // pred_check_branch
      %39 = sbr.rel (0) target = $region13
    $region12: #{tpu_custom_call.1} parent=1 // pred_region
      _
    $region13: #{tpu_custom_call.1} parent=1 // pred_fallthru
      _
    // Predicated region
    $region14: #{tpu_custom_call.1} parent=1 // pred_check
      _
    $region15: #{tpu_custom_call.1} parent=1 // pred_check_branch
      %41 = sbr.rel (0) target = $region17
    $region16: #{tpu_custom_call.1} parent=1 // pred_region
      _
    $region17: #{tpu_custom_call.1} parent=1 // pred_fallthru
      _
    // Predicated region
    $region18: #{tpu_custom_call.1} parent=1 // pred_check
      _
    $region19: #{tpu_custom_call.1} parent=1 // pred_check_branch
      %43 = sbr.rel (0) target = $region21
    $region20: #{tpu_custom_call.1} parent=1 // pred_region
      _
    $region21: #{tpu_custom_call.1} parent=1 // pred_fallthru
      _
    // Predicated region
    $region22: #{tpu_custom_call.1} parent=1 // pred_check
      _
    $region23: #{tpu_custom_call.1} parent=1 // pred_check_branch
      %45 = sbr.rel (0) target = $region25
    $region24: #{tpu_custom_call.1} parent=1 // pred_region
      %47 = dma.done [#allocation4], 896
    $region25: #{tpu_custom_call.1} parent=1 // pred_fallthru
      _
    // Predicated region
    $region26: #{tpu_custom_call.1} parent=1 // pred_check
      _
    $region27: #{tpu_custom_call.1} parent=1 // pred_check_branch
      %49 = sbr.rel (0) target = $region29
    $region28: #{tpu_custom_call.1} parent=1 // pred_region
      %51 = dma.done [#allocation7], 12544
    $region29: #{tpu_custom_call.1} parent=1 // pred_fallthru
      _
    %v53 = vld [vmem:[#allocation3] sm:$0xff]
    %v54 = vld [vmem:[#allocation3 + $0x8] sm:$0xff]
    %v55 = vld [vmem:[#allocation3 + $0x10] sm:$0xff]
    %v56 = vld [vmem:[#allocation3 + $0x18] sm:$0xff]
    %v57 = vld [vmem:[#allocation3 + $0x20] sm:$0xff]
    %v58 = vld [vmem:[#allocation3 + $0x28] sm:$0xff]
    %v59 = vld [vmem:[#allocation3 + $0x30] sm:$0xff]
    %v60 = vpack.c.bf16 %v53, %v53
    %v61 = vpack.c.bf16 %v54, %v54
    %v62 = vpack.c.bf16 %v55, %v55
    %v63 = vpack.c.bf16 %v56, %v56
    %v64 = vpack.c.bf16 %v57, %v57
    %v65 = vpack.c.bf16 %v58, %v58
    %v66 = vpack.c.bf16 %v59, %v59
    %v67 = vld [vmem:[#allocation6] sm:$0xff]
    %v68 = vld [vmem:[#allocation6 + $0x8] sm:$0xff]
    %v69 = vld [vmem:[#allocation6 + $0x10] sm:$0xff]
    %v70 = vld [vmem:[#allocation6 + $0x18] sm:$0xff]
    %v71 = vld [vmem:[#allocation6 + $0x20] sm:$0xff]
    %v72 = vld [vmem:[#allocation6 + $0x28] sm:$0xff]
    %v73 = vld [vmem:[#allocation6 + $0x30] sm:$0xff]
    %v74 = vld [vmem:[#allocation6 + $0x38] sm:$0xff]
    %v75 = vld [vmem:[#allocation6 + $0x40] sm:$0xff]
    %v76 = vld [vmem:[#allocation6 + $0x48] sm:$0xff]
    %v77 = vld [vmem:[#allocation6 + $0x50] sm:$0xff]
    %v78 = vld [vmem:[#allocation6 + $0x58] sm:$0xff]
    %v79 = vld [vmem:[#allocation6 + $0x60] sm:$0xff]
    %v80 = vld [vmem:[#allocation6 + $0x68] sm:$0xff]
    %v81 = vld [vmem:[#allocation6 + $0x70] sm:$0xff]
    %v82 = vld [vmem:[#allocation6 + $0x78] sm:$0xff]
    %v83 = vld [vmem:[#allocation6 + $0x80] sm:$0xff]
    %v84 = vld [vmem:[#allocation6 + $0x88] sm:$0xff]
    %v85 = vld [vmem:[#allocation6 + $0x90] sm:$0xff]
    %v86 = vld [vmem:[#allocation6 + $0x98] sm:$0xff]
    %v87 = vld [vmem:[#allocation6 + $0xa0] sm:$0xff]
    %v88 = vld [vmem:[#allocation6 + $0xa8] sm:$0xff]
    %v89 = vld [vmem:[#allocation6 + $0xb0] sm:$0xff]
    %v90 = vld [vmem:[#allocation6 + $0xb8] sm:$0xff]
    %v91 = vld [vmem:[#allocation6 + $0xc0] sm:$0xff]
    %v92 = vld [vmem:[#allocation6 + $0xc8] sm:$0xff]
    %v93 = vld [vmem:[#allocation6 + $0xd0] sm:$0xff]
    %v94 = vld [vmem:[#allocation6 + $0xd8] sm:$0xff]
    %v95 = vld [vmem:[#allocation6 + $0xe0] sm:$0xff]
    %v96 = vld [vmem:[#allocation6 + $0xe8] sm:$0xff]
    %v97 = vld [vmem:[#allocation6 + $0xf0] sm:$0xff]
    %v98 = vld [vmem:[#allocation6 + $0xf8] sm:$0xff]
    %v99 = vld [vmem:[#allocation6 + $0x100] sm:$0xff]
    %v100 = vld [vmem:[#allocation6 + $0x108] sm:$0xff]
    %v101 = vld [vmem:[#allocation6 + $0x110] sm:$0xff]
    %v102 = vld [vmem:[#allocation6 + $0x118] sm:$0xff]
    %v103 = vld [vmem:[#allocation6 + $0x120] sm:$0xff]
    %v104 = vld [vmem:[#allocation6 + $0x128] sm:$0xff]
    %v105 = vld [vmem:[#allocation6 + $0x130] sm:$0xff]
    %v106 = vld [vmem:[#allocation6 + $0x138] sm:$0xff]
    %v107 = vld [vmem:[#allocation6 + $0x140] sm:$0xff]
    %v108 = vld [vmem:[#allocation6 + $0x148] sm:$0xff]
    %v109 = vld [vmem:[#allocation6 + $0x150] sm:$0xff]
    %v110 = vld [vmem:[#allocation6 + $0x158] sm:$0xff]
    %v111 = vld [vmem:[#allocation6 + $0x160] sm:$0xff]
    %v112 = vld [vmem:[#allocation6 + $0x168] sm:$0xff]
    %v113 = vld [vmem:[#allocation6 + $0x170] sm:$0xff]
    %v114 = vld [vmem:[#allocation6 + $0x178] sm:$0xff]
    %v115 = vld [vmem:[#allocation6 + $0x180] sm:$0xff]
    %v116 = vld [vmem:[#allocation6 + $0x188] sm:$0xff]
    %v117 = vld [vmem:[#allocation6 + $0x190] sm:$0xff]
    %v118 = vld [vmem:[#allocation6 + $0x198] sm:$0xff]
    %v119 = vld [vmem:[#allocation6 + $0x1a0] sm:$0xff]
    %v120 = vld [vmem:[#allocation6 + $0x1a8] sm:$0xff]
    %v121 = vld [vmem:[#allocation6 + $0x1b0] sm:$0xff]
    %v122 = vld [vmem:[#allocation6 + $0x1b8] sm:$0xff]
    %v123 = vld [vmem:[#allocation6 + $0x1c0] sm:$0xff]
    %v124 = vld [vmem:[#allocation6 + $0x1c8] sm:$0xff]
    %v125 = vld [vmem:[#allocation6 + $0x1d0] sm:$0xff]
    %v126 = vld [vmem:[#allocation6 + $0x1d8] sm:$0xff]
    %v127 = vld [vmem:[#allocation6 + $0x1e0] sm:$0xff]
    %v128 = vld [vmem:[#allocation6 + $0x1e8] sm:$0xff]
    %v129 = vld [vmem:[#allocation6 + $0x1f0] sm:$0xff]
    %v130 = vld [vmem:[#allocation6 + $0x1f8] sm:$0xff]
    %v131 = vld [vmem:[#allocation6 + $0x200] sm:$0xff]
    %v132 = vld [vmem:[#allocation6 + $0x208] sm:$0xff]
    %v133 = vld [vmem:[#allocation6 + $0x210] sm:$0xff]
    %v134 = vld [vmem:[#allocation6 + $0x218] sm:$0xff]
    %v135 = vld [vmem:[#allocation6 + $0x220] sm:$0xff]
    %v136 = vld [vmem:[#allocation6 + $0x228] sm:$0xff]
    %v137 = vld [vmem:[#allocation6 + $0x230] sm:$0xff]
    %v138 = vld [vmem:[#allocation6 + $0x238] sm:$0xff]
    %v139 = vld [vmem:[#allocation6 + $0x240] sm:$0xff]
    %v140 = vld [vmem:[#allocation6 + $0x248] sm:$0xff]
    %v141 = vld [vmem:[#allocation6 + $0x250] sm:$0xff]
    %v142 = vld [vmem:[#allocation6 + $0x258] sm:$0xff]
    %v143 = vld [vmem:[#allocation6 + $0x260] sm:$0xff]
    %v144 = vld [vmem:[#allocation6 + $0x268] sm:$0xff]
    %v145 = vld [vmem:[#allocation6 + $0x270] sm:$0xff]
    %v146 = vld [vmem:[#allocation6 + $0x278] sm:$0xff]
    %v147 = vld [vmem:[#allocation6 + $0x280] sm:$0xff]
    %v148 = vld [vmem:[#allocation6 + $0x288] sm:$0xff]
    %v149 = vld [vmem:[#allocation6 + $0x290] sm:$0xff]
    %v150 = vld [vmem:[#allocation6 + $0x298] sm:$0xff]
    %v151 = vld [vmem:[#allocation6 + $0x2a0] sm:$0xff]
    %v152 = vld [vmem:[#allocation6 + $0x2a8] sm:$0xff]
    %v153 = vld [vmem:[#allocation6 + $0x2b0] sm:$0xff]
    %v154 = vld [vmem:[#allocation6 + $0x2b8] sm:$0xff]
    %v155 = vld [vmem:[#allocation6 + $0x2c0] sm:$0xff]
    %v156 = vld [vmem:[#allocation6 + $0x2c8] sm:$0xff]
    %v157 = vld [vmem:[#allocation6 + $0x2d0] sm:$0xff]
    %v158 = vld [vmem:[#allocation6 + $0x2d8] sm:$0xff]
    %v159 = vld [vmem:[#allocation6 + $0x2e0] sm:$0xff]
    %v160 = vld [vmem:[#allocation6 + $0x2e8] sm:$0xff]
    %v161 = vld [vmem:[#allocation6 + $0x2f0] sm:$0xff]
    %v162 = vld [vmem:[#allocation6 + $0x2f8] sm:$0xff]
    %v163 = vld [vmem:[#allocation6 + $0x300] sm:$0xff]
    %v164 = vld [vmem:[#allocation6 + $0x308] sm:$0xff]
    %v165 = vld [vmem:[%s2] sm:$0x3]
    %v167 = vperm.slane %v165, 0
    %v168 = vperm.slane %v165, 1
    %v269 = vunpack.c.l.b16 %v67
    %v270 = vunpack.c.h.b16 %v67
    %v271 = vunpack.c.l.b16 %v68
    %v272 = vunpack.c.h.b16 %v68
    %v273 = vunpack.c.l.b16 %v69
    %v274 = vunpack.c.h.b16 %v69
    %v275 = vunpack.c.l.b16 %v70
    %v276 = vunpack.c.h.b16 %v70
    %v277 = vunpack.c.l.b16 %v71
    %v278 = vunpack.c.h.b16 %v71
    %v279 = vunpack.c.l.b16 %v72
    %v280 = vunpack.c.h.b16 %v72
    %v281 = vunpack.c.l.b16 %v73
    %v282 = vunpack.c.h.b16 %v73
    %v283 = vunpack.c.l.b16 %v74
    %v284 = vunpack.c.h.b16 %v74
    %v285 = vunpack.c.l.b16 %v75
    %v286 = vunpack.c.h.b16 %v75
    %v287 = vunpack.c.l.b16 %v76
    %v288 = vunpack.c.h.b16 %v76
    %v289 = vunpack.c.l.b16 %v77
    %v290 = vunpack.c.h.b16 %v77
    %v291 = vunpack.c.l.b16 %v78
    %v292 = vunpack.c.h.b16 %v78
    %v293 = vunpack.c.l.b16 %v79
    %v294 = vunpack.c.h.b16 %v79
    %v295 = vunpack.c.l.b16 %v80
    %v296 = vunpack.c.h.b16 %v80
    %v297 = vunpack.c.l.b16 %v81
    %v298 = vunpack.c.h.b16 %v81
    %v299 = vunpack.c.l.b16 %v82
    %v300 = vunpack.c.h.b16 %v82
    %v301 = vunpack.c.l.b16 %v83
    %v302 = vunpack.c.h.b16 %v83
    %v303 = vunpack.c.l.b16 %v84
    %v304 = vunpack.c.h.b16 %v84
    %v305 = vunpack.c.l.b16 %v85
    %v306 = vunpack.c.h.b16 %v85
    %v307 = vunpack.c.l.b16 %v86
    %v308 = vunpack.c.h.b16 %v86
    %v309 = vunpack.c.l.b16 %v87
    %v310 = vunpack.c.h.b16 %v87
    %v311 = vunpack.c.l.b16 %v88
    %v312 = vunpack.c.h.b16 %v88
    %v313 = vunpack.c.l.b16 %v89
    %v314 = vunpack.c.h.b16 %v89
    %v315 = vunpack.c.l.b16 %v90
    %v316 = vunpack.c.h.b16 %v90
    %v317 = vunpack.c.l.b16 %v91
    %v318 = vunpack.c.h.b16 %v91
    %v319 = vunpack.c.l.b16 %v92
    %v320 = vunpack.c.h.b16 %v92
    %v321 = vunpack.c.l.b16 %v93
    %v322 = vunpack.c.h.b16 %v93
    %v323 = vunpack.c.l.b16 %v94
    %v324 = vunpack.c.h.b16 %v94
    %v325 = vunpack.c.l.b16 %v95
    %v326 = vunpack.c.h.b16 %v95
    %v327 = vunpack.c.l.b16 %v96
    %v328 = vunpack.c.h.b16 %v96
    %v329 = vunpack.c.l.b16 %v97
    %v330 = vunpack.c.h.b16 %v97
    %v331 = vunpack.c.l.b16 %v98
    %v332 = vunpack.c.h.b16 %v98
    %v333 = vunpack.c.l.b16 %v99
    %v334 = vunpack.c.h.b16 %v99
    %v335 = vunpack.c.l.b16 %v100
    %v336 = vunpack.c.h.b16 %v100
    %v337 = vunpack.c.l.b16 %v101
    %v338 = vunpack.c.h.b16 %v101
    %v339 = vunpack.c.l.b16 %v102
    %v340 = vunpack.c.h.b16 %v102
    %v341 = vunpack.c.l.b16 %v103
    %v342 = vunpack.c.h.b16 %v103
    %v343 = vunpack.c.l.b16 %v104
    %v344 = vunpack.c.h.b16 %v104
    %v345 = vunpack.c.l.b16 %v105
    %v346 = vunpack.c.h.b16 %v105
    %v347 = vunpack.c.l.b16 %v106
    %v348 = vunpack.c.h.b16 %v106
    %v349 = vunpack.c.l.b16 %v107
    %v350 = vunpack.c.h.b16 %v107
    %v351 = vunpack.c.l.b16 %v108
    %v352 = vunpack.c.h.b16 %v108
    %v353 = vunpack.c.l.b16 %v109
    %v354 = vunpack.c.h.b16 %v109
    %v355 = vunpack.c.l.b16 %v110
    %v356 = vunpack.c.h.b16 %v110
    %v357 = vunpack.c.l.b16 %v111
    %v358 = vunpack.c.h.b16 %v111
    %v359 = vunpack.c.l.b16 %v112
    %v360 = vunpack.c.h.b16 %v112
    %v361 = vunpack.c.l.b16 %v113
    %v362 = vunpack.c.h.b16 %v113
    %v363 = vunpack.c.l.b16 %v114
    %v364 = vunpack.c.h.b16 %v114
    %v365 = vunpack.c.l.b16 %v115
    %v366 = vunpack.c.h.b16 %v115
    %v367 = vunpack.c.l.b16 %v116
    %v368 = vunpack.c.h.b16 %v116
    %v369 = vunpack.c.l.b16 %v117
    %v370 = vunpack.c.h.b16 %v117
    %v371 = vunpack.c.l.b16 %v118
    %v372 = vunpack.c.h.b16 %v118
    %v373 = vunpack.c.l.b16 %v119
    %v374 = vunpack.c.h.b16 %v119
    %v375 = vunpack.c.l.b16 %v120
    %v376 = vunpack.c.h.b16 %v120
    %v377 = vunpack.c.l.b16 %v121
    %v378 = vunpack.c.h.b16 %v121
    %v379 = vunpack.c.l.b16 %v122
    %v380 = vunpack.c.h.b16 %v122
    %v381 = vunpack.c.l.b16 %v123
    %v382 = vunpack.c.h.b16 %v123
    %v383 = vunpack.c.l.b16 %v124
    %v384 = vunpack.c.h.b16 %v124
    %v385 = vunpack.c.l.b16 %v125
    %v386 = vunpack.c.h.b16 %v125
    %v387 = vunpack.c.l.b16 %v126
    %v388 = vunpack.c.h.b16 %v126
    %v389 = vunpack.c.l.b16 %v127
    %v390 = vunpack.c.h.b16 %v127
    %v391 = vunpack.c.l.b16 %v128
    %v392 = vunpack.c.h.b16 %v128
    %v393 = vunpack.c.l.b16 %v129
    %v394 = vunpack.c.h.b16 %v129
    %v395 = vunpack.c.l.b16 %v130
    %v396 = vunpack.c.h.b16 %v130
    %v397 = vunpack.c.l.b16 %v131
    %v398 = vunpack.c.h.b16 %v131
    %v399 = vunpack.c.l.b16 %v132
    %v400 = vunpack.c.h.b16 %v132
    %v401 = vunpack.c.l.b16 %v133
    %v402 = vunpack.c.h.b16 %v133
    %v403 = vunpack.c.l.b16 %v134
    %v404 = vunpack.c.h.b16 %v134
    %v405 = vunpack.c.l.b16 %v135
    %v406 = vunpack.c.h.b16 %v135
    %v407 = vunpack.c.l.b16 %v136
    %v408 = vunpack.c.h.b16 %v136
    %v409 = vunpack.c.l.b16 %v137
    %v410 = vunpack.c.h.b16 %v137
    %v411 = vunpack.c.l.b16 %v138
    %v412 = vunpack.c.h.b16 %v138
    %v413 = vunpack.c.l.b16 %v139
    %v414 = vunpack.c.h.b16 %v139
    %v415 = vunpack.c.l.b16 %v140
    %v416 = vunpack.c.h.b16 %v140
    %v417 = vunpack.c.l.b16 %v141
    %v418 = vunpack.c.h.b16 %v141
    %v419 = vunpack.c.l.b16 %v142
    %v420 = vunpack.c.h.b16 %v142
    %v421 = vunpack.c.l.b16 %v143
    %v422 = vunpack.c.h.b16 %v143
    %v423 = vunpack.c.l.b16 %v144
    %v424 = vunpack.c.h.b16 %v144
    %v425 = vunpack.c.l.b16 %v145
    %v426 = vunpack.c.h.b16 %v145
    %v427 = vunpack.c.l.b16 %v146
    %v428 = vunpack.c.h.b16 %v146
    %v429 = vunpack.c.l.b16 %v147
    %v430 = vunpack.c.h.b16 %v147
    %v431 = vunpack.c.l.b16 %v148
    %v432 = vunpack.c.h.b16 %v148
    %v433 = vunpack.c.l.b16 %v149
    %v434 = vunpack.c.h.b16 %v149
    %v435 = vunpack.c.l.b16 %v150
    %v436 = vunpack.c.h.b16 %v150
    %v437 = vunpack.c.l.b16 %v151
    %v438 = vunpack.c.h.b16 %v151
    %v439 = vunpack.c.l.b16 %v152
    %v440 = vunpack.c.h.b16 %v152
    %v441 = vunpack.c.l.b16 %v153
    %v442 = vunpack.c.h.b16 %v153
    %v443 = vunpack.c.l.b16 %v154
    %v444 = vunpack.c.h.b16 %v154
    %v445 = vunpack.c.l.b16 %v155
    %v446 = vunpack.c.h.b16 %v155
    %v447 = vunpack.c.l.b16 %v156
    %v448 = vunpack.c.h.b16 %v156
    %v449 = vunpack.c.l.b16 %v157
    %v450 = vunpack.c.h.b16 %v157
    %v451 = vunpack.c.l.b16 %v158
    %v452 = vunpack.c.h.b16 %v158
    %v453 = vunpack.c.l.b16 %v159
    %v454 = vunpack.c.h.b16 %v159
    %v455 = vunpack.c.l.b16 %v160
    %v456 = vunpack.c.h.b16 %v160
    %v457 = vunpack.c.l.b16 %v161
    %v458 = vunpack.c.h.b16 %v161
    %v459 = vunpack.c.l.b16 %v162
    %v460 = vunpack.c.h.b16 %v162
    %v461 = vunpack.c.l.b16 %v163
    %v462 = vunpack.c.h.b16 %v163
    %v463 = vunpack.c.l.b16 %v164
    %v464 = vunpack.c.h.b16 %v164
    %v465 = vpack.c.b16 %v271, %v269
    %v466 = vpack.c.b16 %v272, %v270
    %v467 = vpack.c.b16 %v275, %v273
    %v468 = vpack.c.b16 %v276, %v274
    %v469 = vpack.c.b16 %v279, %v277
    %v470 = vpack.c.b16 %v280, %v278
    %v471 = vpack.c.b16 %v283, %v281
    %v472 = vpack.c.b16 %v284, %v282
    %v473 = vpack.c.b16 %v287, %v285
    %v474 = vpack.c.b16 %v288, %v286
    %v475 = vpack.c.b16 %v291, %v289
    %v476 = vpack.c.b16 %v292, %v290
    %v477 = vpack.c.b16 %v295, %v293
    %v478 = vpack.c.b16 %v296, %v294
    %v479 = vpack.c.b16 %v299, %v297
    %v480 = vpack.c.b16 %v300, %v298
    %v481 = vpack.c.b16 %v303, %v301
    %v482 = vpack.c.b16 %v304, %v302
    %v483 = vpack.c.b16 %v307, %v305
    %v484 = vpack.c.b16 %v308, %v306
    %v485 = vpack.c.b16 %v311, %v309
    %v486 = vpack.c.b16 %v312, %v310
    %v487 = vpack.c.b16 %v315, %v313
    %v488 = vpack.c.b16 %v316, %v314
    %v489 = vpack.c.b16 %v319, %v317
    %v490 = vpack.c.b16 %v320, %v318
    %v491 = vpack.c.b16 %v323, %v321
    %v492 = vpack.c.b16 %v324, %v322
    %v493 = vpack.c.b16 %v327, %v325
    %v494 = vpack.c.b16 %v328, %v326
    %v495 = vpack.c.b16 %v331, %v329
    %v496 = vpack.c.b16 %v332, %v330
    %v497 = vpack.c.b16 %v335, %v333
    %v498 = vpack.c.b16 %v336, %v334
    %v499 = vpack.c.b16 %v339, %v337
    %v500 = vpack.c.b16 %v340, %v338
    %v501 = vpack.c.b16 %v343, %v341
    %v502 = vpack.c.b16 %v344, %v342
    %v503 = vpack.c.b16 %v347, %v345
    %v504 = vpack.c.b16 %v348, %v346
    %v505 = vpack.c.b16 %v351, %v349
    %v506 = vpack.c.b16 %v352, %v350
    %v507 = vpack.c.b16 %v355, %v353
    %v508 = vpack.c.b16 %v356, %v354
    %v509 = vpack.c.b16 %v359, %v357
    %v510 = vpack.c.b16 %v360, %v358
    %v511 = vpack.c.b16 %v363, %v361
    %v512 = vpack.c.b16 %v364, %v362
    %v513 = vpack.c.b16 %v367, %v365
    %v514 = vpack.c.b16 %v368, %v366
    %v515 = vpack.c.b16 %v371, %v369
    %v516 = vpack.c.b16 %v372, %v370
    %v517 = vpack.c.b16 %v375, %v373
    %v518 = vpack.c.b16 %v376, %v374
    %v519 = vpack.c.b16 %v379, %v377
    %v520 = vpack.c.b16 %v380, %v378
    %v521 = vpack.c.b16 %v383, %v381
    %v522 = vpack.c.b16 %v384, %v382
    %v523 = vpack.c.b16 %v387, %v385
    %v524 = vpack.c.b16 %v388, %v386
    %v525 = vpack.c.b16 %v391, %v389
    %v526 = vpack.c.b16 %v392, %v390
    %v527 = vpack.c.b16 %v395, %v393
    %v528 = vpack.c.b16 %v396, %v394
    %v529 = vpack.c.b16 %v399, %v397
    %v530 = vpack.c.b16 %v400, %v398
    %v531 = vpack.c.b16 %v403, %v401
    %v532 = vpack.c.b16 %v404, %v402
    %v533 = vpack.c.b16 %v407, %v405
    %v534 = vpack.c.b16 %v408, %v406
    %v535 = vpack.c.b16 %v411, %v409
    %v536 = vpack.c.b16 %v412, %v410
    %v537 = vpack.c.b16 %v415, %v413
    %v538 = vpack.c.b16 %v416, %v414
    %v539 = vpack.c.b16 %v419, %v417
    %v540 = vpack.c.b16 %v420, %v418
    %v541 = vpack.c.b16 %v423, %v421
    %v542 = vpack.c.b16 %v424, %v422
    %v543 = vpack.c.b16 %v427, %v425
    %v544 = vpack.c.b16 %v428, %v426
    %v545 = vpack.c.b16 %v431, %v429
    %v546 = vpack.c.b16 %v432, %v430
    %v547 = vpack.c.b16 %v435, %v433
    %v548 = vpack.c.b16 %v436, %v434
    %v549 = vpack.c.b16 %v439, %v437
    %v550 = vpack.c.b16 %v440, %v438
    %v551 = vpack.c.b16 %v443, %v441
    %v552 = vpack.c.b16 %v444, %v442
    %v553 = vpack.c.b16 %v447, %v445
    %v554 = vpack.c.b16 %v448, %v446
    %v555 = vpack.c.b16 %v451, %v449
    %v556 = vpack.c.b16 %v452, %v450
    %v557 = vpack.c.b16 %v455, %v453
    %v558 = vpack.c.b16 %v456, %v454
    %v559 = vpack.c.b16 %v459, %v457
    %v560 = vpack.c.b16 %v460, %v458
    %v561 = vpack.c.b16 %v463, %v461
    %v562 = vpack.c.b16 %v464, %v462
    %vm661 = vcmask 130048
    %v663 = vsel %vm661, %v66, 0
    %665 = vmatpush.bf16.msra.mxu0 %v479
    %666 = vmatpush.bf16.msra.mxu0 %v477
    %667 = vmatpush.bf16.msra.mxu0 %v475
    %668 = vmatpush.bf16.msra.mxu0 %v473
    %669 = vmatpush.bf16.msra.mxu0 %v471
    %670 = vmatpush.bf16.msra.mxu0 %v469
    %671 = vmatpush.bf16.msra.mxu0 %v467
    %672 = vmatpush.bf16.msra.mxu0 %v465
    %673 = vmatmul.bf16.gmra.mxu0 %v60
    %v674 = vpop.f32.mrf.mxu0
    %v675 = vadd.f32 %v167, %v674
    %v676 = vpop.f32.mrf.mxu0
    %677 = vdwg.mxu0
    %678 = vmatpush.bf16.msra.mxu0 %v495
    %679 = vmatpush.bf16.msra.mxu0 %v493
    %680 = vmatpush.bf16.msra.mxu0 %v491
    %681 = vmatpush.bf16.msra.mxu0 %v489
    %682 = vmatpush.bf16.msra.mxu0 %v487
    %683 = vmatpush.bf16.msra.mxu0 %v485
    %684 = vmatpush.bf16.msra.mxu0 %v483
    %685 = vmatpush.bf16.msra.mxu0 %v481
    %686 = vmatmul.bf16.gmra.mxu0 %v61
    %v687 = vpop.f32.mrf.mxu0
    %v688 = vadd.f32 %v675, %v687
    %v689 = vpop.f32.mrf.mxu0
    %690 = vdwg.mxu0
    %691 = vmatpush.bf16.msra.mxu0 %v511
    %692 = vmatpush.bf16.msra.mxu0 %v509
    %693 = vmatpush.bf16.msra.mxu0 %v507
    %694 = vmatpush.bf16.msra.mxu0 %v505
    %695 = vmatpush.bf16.msra.mxu0 %v503
    %696 = vmatpush.bf16.msra.mxu0 %v501
    %697 = vmatpush.bf16.msra.mxu0 %v499
    %698 = vmatpush.bf16.msra.mxu0 %v497
    %699 = vmatmul.bf16.gmra.mxu0 %v62
    %v700 = vpop.f32.mrf.mxu0
    %v701 = vadd.f32 %v688, %v700
    %v702 = vpop.f32.mrf.mxu0
    %703 = vdwg.mxu0
    %704 = vmatpush.bf16.msra.mxu0 %v527
    %705 = vmatpush.bf16.msra.mxu0 %v525
    %706 = vmatpush.bf16.msra.mxu0 %v523
    %707 = vmatpush.bf16.msra.mxu0 %v521
    %708 = vmatpush.bf16.msra.mxu0 %v519
    %709 = vmatpush.bf16.msra.mxu0 %v517
    %710 = vmatpush.bf16.msra.mxu0 %v515
    %711 = vmatpush.bf16.msra.mxu0 %v513
    %712 = vmatmul.bf16.gmra.mxu0 %v63
    %v713 = vpop.f32.mrf.mxu0
    %v714 = vadd.f32 %v701, %v713
    %v715 = vpop.f32.mrf.mxu0
    %716 = vdwg.mxu0
    %717 = vmatpush.bf16.msra.mxu0 %v543
    %718 = vmatpush.bf16.msra.mxu0 %v541
    %719 = vmatpush.bf16.msra.mxu0 %v539
    %720 = vmatpush.bf16.msra.mxu0 %v537
    %721 = vmatpush.bf16.msra.mxu0 %v535
    %722 = vmatpush.bf16.msra.mxu0 %v533
    %723 = vmatpush.bf16.msra.mxu0 %v531
    %724 = vmatpush.bf16.msra.mxu0 %v529
    %725 = vmatmul.bf16.gmra.mxu0 %v64
    %v726 = vpop.f32.mrf.mxu0
    %v727 = vadd.f32 %v714, %v726
    %v728 = vpop.f32.mrf.mxu0
    %729 = vdwg.mxu0
    %730 = vmatpush.bf16.msra.mxu0 %v559
    %731 = vmatpush.bf16.msra.mxu0 %v557
    %732 = vmatpush.bf16.msra.mxu0 %v555
    %733 = vmatpush.bf16.msra.mxu0 %v553
    %734 = vmatpush.bf16.msra.mxu0 %v551
    %735 = vmatpush.bf16.msra.mxu0 %v549
    %736 = vmatpush.bf16.msra.mxu0 %v547
    %737 = vmatpush.bf16.msra.mxu0 %v545
    %738 = vmatmul.bf16.gmra.mxu0 %v65
    %v739 = vpop.f32.mrf.mxu0
    %v740 = vadd.f32 %v727, %v739
    %v741 = vpop.f32.mrf.mxu0
    %742 = vdwg.mxu0
    %743 = vmatpush.bf16.msra.mxu0 0
    %744 = vmatpush.bf16.msra.mxu0 0
    %745 = vmatpush.bf16.msra.mxu0 0
    %746 = vmatpush.bf16.msra.mxu0 0
    %747 = vmatpush.bf16.msra.mxu0 0
    %748 = vmatpush.bf16.msra.mxu0 0
    %749 = vmatpush.bf16.msra.mxu0 0
    %750 = vmatpush.bf16.msra.mxu0 %v561
    %751 = vmatmul.bf16.gmra.mxu0 %v663
    %v752 = vpop.f32.mrf.mxu0
    %v753 = vadd.f32 %v740, %v752
    %v754 = vpop.f32.mrf.mxu0
    %755 = vdwg.mxu0
    %756 = vmatpush.bf16.msra.mxu0 %v480
    %757 = vmatpush.bf16.msra.mxu0 %v478
    %758 = vmatpush.bf16.msra.mxu0 %v476
    %759 = vmatpush.bf16.msra.mxu0 %v474
    %760 = vmatpush.bf16.msra.mxu0 %v472
    %761 = vmatpush.bf16.msra.mxu0 %v470
    %762 = vmatpush.bf16.msra.mxu0 %v468
    %763 = vmatpush.bf16.msra.mxu0 %v466
    %764 = vmatmul.bf16.gmra.mxu0 %v60
    %v765 = vpop.f32.mrf.mxu0
    %v766 = vadd.f32 %v168, %v765
    %v767 = vpop.f32.mrf.mxu0
    %768 = vdwg.mxu0
    %769 = vmatpush.bf16.msra.mxu0 %v496
    %770 = vmatpush.bf16.msra.mxu0 %v494
    %771 = vmatpush.bf16.msra.mxu0 %v492
    %772 = vmatpush.bf16.msra.mxu0 %v490
    %773 = vmatpush.bf16.msra.mxu0 %v488
    %774 = vmatpush.bf16.msra.mxu0 %v486
    %775 = vmatpush.bf16.msra.mxu0 %v484
    %776 = vmatpush.bf16.msra.mxu0 %v482
    %777 = vmatmul.bf16.gmra.mxu0 %v61
    %v778 = vpop.f32.mrf.mxu0
    %v779 = vadd.f32 %v766, %v778
    %v780 = vpop.f32.mrf.mxu0
    %781 = vdwg.mxu0
    %782 = vmatpush.bf16.msra.mxu0 %v512
    %783 = vmatpush.bf16.msra.mxu0 %v510
    %784 = vmatpush.bf16.msra.mxu0 %v508
    %785 = vmatpush.bf16.msra.mxu0 %v506
    %786 = vmatpush.bf16.msra.mxu0 %v504
    %787 = vmatpush.bf16.msra.mxu0 %v502
    %788 = vmatpush.bf16.msra.mxu0 %v500
    %789 = vmatpush.bf16.msra.mxu0 %v498
    %790 = vmatmul.bf16.gmra.mxu0 %v62
    %v791 = vpop.f32.mrf.mxu0
    %v792 = vadd.f32 %v779, %v791
    %v793 = vpop.f32.mrf.mxu0
    %794 = vdwg.mxu0
    %795 = vmatpush.bf16.msra.mxu0 %v528
    %796 = vmatpush.bf16.msra.mxu0 %v526
    %797 = vmatpush.bf16.msra.mxu0 %v524
    %798 = vmatpush.bf16.msra.mxu0 %v522
    %799 = vmatpush.bf16.msra.mxu0 %v520
    %800 = vmatpush.bf16.msra.mxu0 %v518
    %801 = vmatpush.bf16.msra.mxu0 %v516
    %802 = vmatpush.bf16.msra.mxu0 %v514
    %803 = vmatmul.bf16.gmra.mxu0 %v63
    %v804 = vpop.f32.mrf.mxu0
    %v805 = vadd.f32 %v792, %v804
    %v806 = vpop.f32.mrf.mxu0
    %807 = vdwg.mxu0
    %808 = vmatpush.bf16.msra.mxu0 %v544
    %809 = vmatpush.bf16.msra.mxu0 %v542
    %810 = vmatpush.bf16.msra.mxu0 %v540
    %811 = vmatpush.bf16.msra.mxu0 %v538
    %812 = vmatpush.bf16.msra.mxu0 %v536
    %813 = vmatpush.bf16.msra.mxu0 %v534
    %814 = vmatpush.bf16.msra.mxu0 %v532
    %815 = vmatpush.bf16.msra.mxu0 %v530
    %816 = vmatmul.bf16.gmra.mxu0 %v64
    %v817 = vpop.f32.mrf.mxu0
    %v818 = vadd.f32 %v805, %v817
    %v819 = vpop.f32.mrf.mxu0
    %820 = vdwg.mxu0
    %821 = vmatpush.bf16.msra.mxu0 %v560
    %822 = vmatpush.bf16.msra.mxu0 %v558
    %823 = vmatpush.bf16.msra.mxu0 %v556
    %824 = vmatpush.bf16.msra.mxu0 %v554
    %825 = vmatpush.bf16.msra.mxu0 %v552
    %826 = vmatpush.bf16.msra.mxu0 %v550
    %827 = vmatpush.bf16.msra.mxu0 %v548
    %828 = vmatpush.bf16.msra.mxu0 %v546
    %829 = vmatmul.bf16.gmra.mxu0 %v65
    %v830 = vpop.f32.mrf.mxu0
    %v831 = vadd.f32 %v818, %v830
    %v832 = vpop.f32.mrf.mxu0
    %833 = vdwg.mxu0
    %834 = vmatpush.bf16.msra.mxu0 0
    %835 = vmatpush.bf16.msra.mxu0 0
    %836 = vmatpush.bf16.msra.mxu0 0
    %837 = vmatpush.bf16.msra.mxu0 0
    %838 = vmatpush.bf16.msra.mxu0 0
    %839 = vmatpush.bf16.msra.mxu0 0
    %840 = vmatpush.bf16.msra.mxu0 0
    %841 = vmatpush.bf16.msra.mxu0 %v562
    %842 = vmatmul.bf16.gmra.mxu0 %v663
    %v843 = vpop.f32.mrf.mxu0
    %v844 = vadd.f32 %v831, %v843
    %v845 = vpop.f32.mrf.mxu0
    %846 = vdwg.mxu0
    %v847 = vmax.f32 %v753, 0.0
    %v848 = vmax.f32 %v844, 0.0
    %v849 = vld [vmem:[%s3] sm:$0x3]
    %v850 = vpack.c.bf16 %v847, %v847
    %v851 = vpack.c.bf16 %v848, %v848
    %s852 = sld [smem:[#allocation2]]
    %v853 = vstv %s852
    %855 = vst [vmem:[#allocation1] ss:$9 sm:$0xff] %v849
    %v856 = vld [vmem:[#allocation1] sm:$0xff]
    %v857 = vld [vmem:[#allocation1 + $0x9] sm:$0xff]
    %860 = vmatpush.bf16.xpose.msra.mxu0 0
    %861 = vmatpush.bf16.xpose.msra.mxu0 0
    %862 = vmatpush.bf16.xpose.msra.mxu0 0
    %863 = vmatpush.bf16.xpose.msra.mxu0 0
    %864 = vmatpush.bf16.xpose.msra.mxu0 0
    %865 = vmatpush.bf16.xpose.msra.mxu0 0
    %866 = vmatpush.bf16.xpose.msra.mxu0 0
    %867 = vmatpush.bf16.xpose.msra.mxu0 %v850
    %868 = vmatmul.bf16.gmra.mxu0 %v856
    %v869 = vpop.f32.mrf.mxu0
    %v870 = vadd.f32 %v853, %v869
    %v871 = vpop.f32.mrf.mxu0
    %872 = vdwg.mxu0
    %873 = vmatpush.bf16.xpose.msra.mxu0 0
    %874 = vmatpush.bf16.xpose.msra.mxu0 0
    %875 = vmatpush.bf16.xpose.msra.mxu0 0
    %876 = vmatpush.bf16.xpose.msra.mxu0 0
    %877 = vmatpush.bf16.xpose.msra.mxu0 0
    %878 = vmatpush.bf16.xpose.msra.mxu0 0
    %879 = vmatpush.bf16.xpose.msra.mxu0 0
    %880 = vmatpush.bf16.xpose.msra.mxu0 %v851
    %881 = vmatmul.bf16.gmra.mxu0 %v857
    %v882 = vpop.f32.mrf.mxu0
    %v883 = vadd.f32 %v870, %v882
    %v884 = vpop.f32.mrf.mxu0
    %885 = vdwg.mxu0
    %v886 = vsub.f32 0.0, %v883
    %v887 = vmul.f32 %v886, 1.442695
    %v888 = vpow.pop %v887
    %v889 = vadd.f32 %v888, 1.0
    %v890 = vrcp.pop %v889
    %vm891 = vcmask 57344
    %892 = vst.msk [vmem:[#allocation8] sm:$0x1] %vm891, %v890
    // Predicated region
    $region30: #{tpu_custom_call.1} parent=1 // pred_check
      _
    $region31: #{tpu_custom_call.1} parent=1 // pred_check_branch
      %894 = sbr.rel (0) target = $region33
    $region32: #{tpu_custom_call.1} parent=1 // pred_region
      %896 = vsyncadd [#allocation5], 0
      %s898 = sshll.u32 [#allocation8], 4
      %s899 = int_to_ptr.vmem [resolvable:$true] %s898
      %s900 = sshll.u32 %s5, 4
      %s901 = int_to_ptr.hbm [resolvable:$true] %s900
      %903 = dma.vmem_to_hbm [thread:$0]  %s899, 16, %s901, [#allocation5]
    $region33: #{tpu_custom_call.1} parent=1 // pred_fallthru
      _
    // Predicated region
    $region34: #{tpu_custom_call.1} parent=1 // pred_check
      _
    $region35: #{tpu_custom_call.1} parent=1 // pred_check_branch
      %905 = sbr.rel (0) target = $region37
    $region36: #{tpu_custom_call.1} parent=1 // pred_region
      %907 = dma.done [#allocation5], 16
    $region37: #{tpu_custom_call.1} parent=1 // pred_fallthru
      _
    %908 = vsyncpa [#allocation4], 1
    %909 = vsyncpa [#allocation7], 1
    %910 = vsyncpa [#allocation5], 1

</llo_original>
